<compile_context>
chip_gen: v5e
topology: v5e:2x2
jax: 0.10.0
libtpu: 0.0.40
codegen_flags: <defaults>
</compile_context>

<pallas_src>
import functools

import jax
import jax.numpy as jnp
from jax import lax
from jax.experimental import pallas as pl
from jax.experimental.pallas import tpu as pltpu


def _conv_rowmm_kernel(x_ref, m_ref, b_ref, o_ref):
    # x_ref: (B_blk, Hp, Wpc_pad)      padded, channel-flattened, lane-padded rows
    # m_ref: (K*Wpc_pad, W*Cout)       block-Toeplitz folded conv weight
    # b_ref: (1, W*Cout)  f32          bias tiled across W
    # o_ref: (B_blk, H, W*Cout)        lane-dense conv output
    B_blk, H, WCout = o_ref.shape
    Hp = x_ref.shape[1]
    Wpc_pad = x_ref.shape[2]
    K = Hp - H + 1
    M = B_blk * H

    x = x_ref[...]                                          # (B_blk, Hp, Wpc_pad)

    # Fold the K row taps into the contraction.  Each slab is exactly Wpc_pad
    # lanes wide (multiple of 128), so the concat along lanes is vreg-aligned.
    slabs = [x[:, kh:kh + H, :].reshape(M, Wpc_pad) for kh in range(K)]
    patch = jnp.concatenate(slabs, axis=1)                  # (M, K*Wpc_pad)

    # Single MXU matmul (batch folded into M), f32 accumulate.
    acc = jnp.dot(patch, m_ref[...], preferred_element_type=jnp.float32)
    acc = acc + b_ref[...]                                  # f32 bias, broadcast rows

    o_ref[...] = acc.reshape(B_blk, H, WCout).astype(o_ref.dtype)


def prepare_conv_end_params(weight_oihw, bias, width, *, compute_dtype=jnp.float32):
    """Fold the conv weight once per weight update (hoisted out of the forward).

    Returns:
      m_mat:   (K * Wpc_pad, W * Cout) block-Toeplitz weight in compute_dtype
               (kw taps live inside the contraction; rows for lane padding are 0)
      b_tiled: (1, W * Cout) float32 bias tiled across W
    """
    Cout, Cin, K, _ = weight_oihw.shape
    pad = K // 2
    Wp = width + 2 * pad
    Wpc = Wp * Cin
    Wpc_pad = -(-Wpc // 128) * 128                          # lane-align each row slab

    # m[kh, wp, ci, w, co] = weight[co, ci, kh, wp - w] for 0 <= wp - w < K else 0
    w_kkio = jnp.transpose(weight_oihw, (2, 3, 1, 0)).astype(jnp.float32)  # [K,K,Cin,Cout]
    sel = jnp.stack([jnp.eye(Wp, width, k=-kw, dtype=jnp.float32)
                     for kw in range(K)])                   # [K, Wp, W]
    m5 = jnp.einsum("qpw,kqio->kpiwo", sel, w_kkio)         # [K, Wp, Cin, W, Cout]
    m_mat = m5.reshape(K, Wpc, width * Cout)
    m_mat = jnp.pad(m_mat, ((0, 0), (0, Wpc_pad - Wpc), (0, 0)))
    m_mat = m_mat.reshape(K * Wpc_pad, width * Cout).astype(compute_dtype)

    # Keep bias in f32 so the f32 accumulator gets a full-precision bias.
    b_tiled = jnp.tile(bias.astype(jnp.float32), width).reshape(1, width * Cout)
    return m_mat, b_tiled


def conv_end_forward(x_nchw, m_mat, b_tiled, *, kernel_size=5, ratio=2):
    """Forward pass of conv_end with pre-folded params.

    x_nchw:  [N, Cin, H, W]   (PyTorch NCHW)
    m_mat:   from prepare_conv_end_params
    b_tiled: from prepare_conv_end_params
    returns: [N, Cout // ratio^2, H*ratio, W*ratio]
    """
    N, Cin, H, W = x_nchw.shape
    K = kernel_size
    r = ratio
    pad = K // 2
    Hp, Wp = H + 2 * pad, W + 2 * pad
    Wpc = Wp * Cin
    Wpc_pad = m_mat.shape[0] // K
    WCout = m_mat.shape[1]
    Cout = WCout // W
    assert Cout % (r * r) == 0
    dt_out = x_nchw.dtype
    dt_cmp = m_mat.dtype

    # ---- glue: NCHW -> padded NHWC, channel-flattened rows, lane-padded ----
    x_nhwc = jnp.transpose(x_nchw, (0, 2, 3, 1))                       # [N,H,W,Cin]
    x_pad = jnp.pad(x_nhwc, ((0, 0), (pad, pad), (pad, pad), (0, 0)))  # [N,Hp,Wp,Cin]
    x_flat = x_pad.reshape(N, Hp, Wpc)
    if Wpc_pad != Wpc:
        x_flat = jnp.pad(x_flat, ((0, 0), (0, 0), (0, Wpc_pad - Wpc)))
    x_flat = x_flat.astype(dt_cmp)                                     # bf16 path: halves DMA

    # ---- batch blocking: collapse batch into matmul M (target >= 256 rows) ----
    B_blk = max(1, min(N, -(-256 // H)))
    Npad = -(-N // B_blk) * B_blk
    if Npad != N:
        x_flat = jnp.pad(x_flat, ((0, Npad - N), (0, 0), (0, 0)))

    conv_out = pl.pallas_call(
        _conv_rowmm_kernel,
        out_shape=jax.ShapeDtypeStruct((Npad, H, WCout), dt_out),
        grid_spec=pltpu.PrefetchScalarGridSpec(
            num_scalar_prefetch=0,
            grid=(Npad // B_blk,),
            in_specs=[
                pl.BlockSpec((B_blk, Hp, Wpc_pad), lambda n: (n, 0, 0)),
                # constant index_map -> weight/bias stay VMEM-resident across steps
                pl.BlockSpec((K * Wpc_pad, WCout), lambda n: (0, 0)),
                pl.BlockSpec((1, WCout), lambda n: (0, 0)),
            ],
            out_specs=pl.BlockSpec((B_blk, H, WCout), lambda n: (n, 0, 0)),
        ),
        # default scoped-VMEM limit is ample for this working set; do NOT request
        # the whole physical VMEM (64 MiB is all of it on v7x).
        compiler_params=pltpu.CompilerParams(
            dimension_semantics=("parallel",),
        ),
    )(x_flat, m_mat, b_tiled)

    if Npad != N:
        conv_out = conv_out[:N]

    # ---- glue: PixelShuffle(r) + NHWC->NCHW as ONE fused transpose ----
    Cps = Cout // (r * r)
    y = conv_out.reshape(N, H, W, Cps, r, r)       # channel = cps*r*r + i*r + j
    y = jnp.transpose(y, (0, 3, 1, 4, 2, 5))       # [N, Cps, H, r, W, r]
    y = y.reshape(N, Cps, H * r, W * r)
    return y


def _reference(x_nchw, weight_oihw, bias, ratio=2):
    # pure-JAX reference (XLA conv + pixel shuffle) for correctness checking
    K = weight_oihw.shape[-1]
    pad = K // 2
    y = lax.conv_general_dilated(
        x_nchw, weight_oihw, window_strides=(1, 1),
        padding=((pad, pad), (pad, pad)),
        dimension_numbers=("NCHW", "OIHW", "NCHW"))
    y = y + bias.reshape(1, -1, 1, 1)
    N, C, H, W = y.shape
    r = ratio
    y = y.reshape(N, C // (r * r), r, r, H, W)
    y = jnp.transpose(y, (0, 1, 4, 2, 5, 3)).reshape(N, C // (r * r), H * r, W * r)
    return y


if __name__ == "__main__":
    # small shapes consistent with the module: conv_end(in_channels=4,
    # out_channels=8, kernel_size=5, ratio=2)  (out_channels divisible by r^2)
    N, Cin, H, W = 2, 4, 16, 16
    Cout, K, ratio = 8, 5, 2

    key = jax.random.PRNGKey(0)
    kx, kw, kb = jax.random.split(key, 3)
    x = jax.random.normal(kx, (N, Cin, H, W), dtype=jnp.float32)
    weight = 0.1 * jax.random.normal(kw, (Cout, Cin, K, K), dtype=jnp.float32)
    bias = 0.1 * jax.random.normal(kb, (Cout,), dtype=jnp.float32)

    fwd = jax.jit(functools.partial(conv_end_forward, kernel_size=K, ratio=ratio))

    # f32 path (tight tolerance); weight fold hoisted out of the forward path.
    m32, b32 = prepare_conv_end_params(weight, bias, W, compute_dtype=jnp.float32)
    out = jax.block_until_ready(fwd(x, m32, b32))

    ref = _reference(x, weight, bias, ratio=ratio)
    assert out.shape == (N, Cout // (ratio * ratio), H * ratio, W * ratio), out.shape
    assert jnp.allclose(out, ref, atol=1e-4, rtol=1e-4), float(jnp.max(jnp.abs(out - ref)))

    # bf16-input / f32-accumulate path (full-rate MXU on v6e/v7x); looser tolerance.
    mbf, bbf = prepare_conv_end_params(weight, bias, W, compute_dtype=jnp.bfloat16)
    out_bf = jax.block_until_ready(fwd(x, mbf, bbf))
    assert jnp.allclose(out_bf, ref, atol=1e-1, rtol=1e-1), \
        float(jnp.max(jnp.abs(out_bf - ref)))

    print("KERNEL_OK")
</pallas_src>

<mosaic_0001>
module attributes {stable_mosaic.version = 11 : i64} {
  func.func @_conv_rowmm_kernel(%arg0: i32, %arg1: memref<2x20x128xf32, #tpu.memory_space<vmem>>, %arg2: memref<640x128xf32, #tpu.memory_space<vmem>>, %arg3: memref<1x128xf32, #tpu.memory_space<vmem>>, %arg4: memref<2x16x128xf32, #tpu.memory_space<vmem>>) attributes {dimension_semantics = [#tpu.dimension_semantics<parallel>], iteration_bounds = array<i64: 1>, scalar_prefetch = 0 : i64, scratch_operands = 0 : i64, tpu.core_type = #tpu.core_type<tc>, window_params = [{transform_indices = @transform_0, window_bounds = array<i64: 2, 20, 128>}, {pipeline_mode = #tpu.pipeline_mode<synchronous>, transform_indices = @transform_1, window_bounds = array<i64: 640, 128>}, {pipeline_mode = #tpu.pipeline_mode<synchronous>, transform_indices = @transform_2, window_bounds = array<i64: 1, 128>}, {transform_indices = @transform_3, window_bounds = array<i64: 2, 16, 128>}]} {
    %c0 = arith.constant 0 : index
    %c0_0 = arith.constant 0 : index
    %c0_1 = arith.constant 0 : index
    %0 = vector.load %arg1[%c0, %c0_0, %c0_1] : memref<2x20x128xf32, #tpu.memory_space<vmem>>, vector<2x20x128xf32>
    %1 = vector.extract_strided_slice %0 {offsets = [0, 0, 0], sizes = [2, 16, 128], strides = [1, 1, 1]} : vector<2x20x128xf32> to vector<2x16x128xf32>
    %2 = vector.shape_cast %1 : vector<2x16x128xf32> to vector<32x128xf32>
    %3 = vector.extract_strided_slice %0 {offsets = [0, 1, 0], sizes = [2, 16, 128], strides = [1, 1, 1]} : vector<2x20x128xf32> to vector<2x16x128xf32>
    %4 = vector.shape_cast %3 : vector<2x16x128xf32> to vector<32x128xf32>
    %5 = vector.extract_strided_slice %0 {offsets = [0, 2, 0], sizes = [2, 16, 128], strides = [1, 1, 1]} : vector<2x20x128xf32> to vector<2x16x128xf32>
    %6 = vector.shape_cast %5 : vector<2x16x128xf32> to vector<32x128xf32>
    %7 = vector.extract_strided_slice %0 {offsets = [0, 3, 0], sizes = [2, 16, 128], strides = [1, 1, 1]} : vector<2x20x128xf32> to vector<2x16x128xf32>
    %8 = vector.shape_cast %7 : vector<2x16x128xf32> to vector<32x128xf32>
    %9 = vector.extract_strided_slice %0 {offsets = [0, 4, 0], sizes = [2, 16, 128], strides = [1, 1, 1]} : vector<2x20x128xf32> to vector<2x16x128xf32>
    %10 = vector.shape_cast %9 : vector<2x16x128xf32> to vector<32x128xf32>
    %11 = tpu.concatenate %2, %4, %6, %8, %10 in 1 : vector<32x128xf32>, vector<32x128xf32>, vector<32x128xf32>, vector<32x128xf32>, vector<32x128xf32> -> vector<32x640xf32>
    %c0_2 = arith.constant 0 : index
    %c0_3 = arith.constant 0 : index
    %12 = vector.load %arg2[%c0_2, %c0_3] : memref<640x128xf32, #tpu.memory_space<vmem>>, vector<640x128xf32>
    %cst = arith.constant dense<0.000000e+00> : vector<32x128xf32>
    %13 = tpu.matmul %11, %12, %cst {dimension_numbers = #tpu.dot_dimension_numbers<[1], [0], [0], [1], [0, 0, 1, 1], [], []>} : vector<32x640xf32>, vector<640x128xf32>, vector<32x128xf32> -> vector<32x128xf32>
    %c0_4 = arith.constant 0 : index
    %c0_5 = arith.constant 0 : index
    %14 = vector.load %arg3[%c0_4, %c0_5] : memref<1x128xf32, #tpu.memory_space<vmem>>, vector<1x128xf32>
    %15 = vector.broadcast %14 : vector<1x128xf32> to vector<32x128xf32>
    %16 = arith.addf %13, %15 : vector<32x128xf32>
    %17 = vector.shape_cast %16 : vector<32x128xf32> to vector<2x16x128xf32>
    %c0_6 = arith.constant 0 : index
    %c0_7 = arith.constant 0 : index
    %c0_8 = arith.constant 0 : index
    %18 = vector.load %arg4[%c0_6, %c0_7, %c0_8] : memref<2x16x128xf32, #tpu.memory_space<vmem>>, vector<2x16x128xf32>
    tpu.vector_store %arg4[%c0_6, %c0_7, %c0_8], %17 {strides = array<i32>} : memref<2x16x128xf32, #tpu.memory_space<vmem>>, vector<2x16x128xf32>,
    return
  }
  func.func @transform_0(%arg0: i32) -> (i32, i32, i32) {
    %c0_i32 = arith.constant 0 : i32
    %c0_i32_0 = arith.constant 0 : i32
    %c0_i32_1 = arith.constant 0 : i32
    return %arg0, %c0_i32, %c0_i32_0 : i32, i32, i32
  }
  func.func @transform_1(%arg0: i32) -> (i32, i32) {
    %c0_i32 = arith.constant 0 : i32
    %c0_i32_0 = arith.constant 0 : i32
    %c0_i32_1 = arith.constant 0 : i32
    return %c0_i32, %c0_i32_0 : i32, i32
  }
  func.func @transform_2(%arg0: i32) -> (i32, i32) {
    %c0_i32 = arith.constant 0 : i32
    %c0_i32_0 = arith.constant 0 : i32
    %c0_i32_1 = arith.constant 0 : i32
    return %c0_i32, %c0_i32_0 : i32, i32
  }
  func.func @transform_3(%arg0: i32) -> (i32, i32, i32) {
    %c0_i32 = arith.constant 0 : i32
    %c0_i32_0 = arith.constant 0 : i32
    %c0_i32_1 = arith.constant 0 : i32
    return %arg0, %c0_i32, %c0_i32_0 : i32, i32, i32
  }
}

</mosaic_0001>

<llo_original>
// kernel: conv_end_forward.1
$region0: #{conv_end_forward.1}
  #allocation0 [shape = 'u32[]', space=smem, size = 0x4, offset = 0x4, fixed_abs, tag = 'smem constant byte address 0x4 - core index']
  #allocation1 [shape = 'u32[72,128]{1,0:T(1,128)}', space=vmem, size = 0x9000, scoped, tag = 'internal scratch']
  %s0 = inlined_call_operand.vmem [shape: f32[2,20,128], index: 0, kind: input, shape index: {}]
  %s1 = inlined_call_operand.vmem [shape: f32[640,128], index: 1, kind: input, shape index: {}]
  %s2 = inlined_call_operand.vmem [shape: f32[1,128], index: 2, kind: input, shape index: {}]
  %s3 = inlined_call_operand.vmem [shape: f32[2,16,128], index: 3, kind: output, shape index: {}]
  %s4 = sld [smem:[#allocation0]]
  $region22: #{conv_end_forward.1} parent=0
    _
  %s6 = ssub.s32 1, %s4
  %s7 = scalar_select 0, %s6, %s4
  // Predicated region
  $region2: #{conv_end_forward.1} parent=0 // pred_check
    _
  $region3: #{conv_end_forward.1} parent=0 // pred_check_branch
    %9 = sbr.rel (0) target = $region5
  $region4: #{conv_end_forward.1} parent=0 // pred_region
    _
  $region5: #{conv_end_forward.1} parent=0 // pred_fallthru
    _
  // Predicated region
  $region6: #{conv_end_forward.1} parent=0 // pred_check
    _
  $region7: #{conv_end_forward.1} parent=0 // pred_check_branch
    %11 = sbr.rel (0) target = $region9
  $region8: #{conv_end_forward.1} parent=0 // pred_region
    _
  $region9: #{conv_end_forward.1} parent=0 // pred_fallthru
    _
  // Predicated region
  $region10: #{conv_end_forward.1} parent=0 // pred_check
    _
  $region11: #{conv_end_forward.1} parent=0 // pred_check_branch
    %13 = sbr.rel (0) target = $region13
  $region12: #{conv_end_forward.1} parent=0 // pred_region
    _
  $region13: #{conv_end_forward.1} parent=0 // pred_fallthru
    _
  %v14 = vld [vmem:[%s0] sm:$0xff]
  %v15 = vld [vmem:[%s0 + $0x8] sm:$0xff]
  %v16 = vld [vmem:[%s0 + $0x10] sm:$0xf]
  %v17 = vld [vmem:[%s0 + $0x18] sm:$0xff]
  %v18 = vld [vmem:[%s0 + $0x20] sm:$0xff]
  %v19 = vld [vmem:[%s0 + $0x28] sm:$0xf]
  %vm26 = vcmask 1046528
  %v27 = vrot.slane %v14, 1
  %v28 = vrot.slane %v15, 1
  %v29 = vsel %vm26, %v27, %v28
  %v30 = vrot.slane %v16, 1
  %v31 = vsel %vm26, %v28, %v30
  %v32 = vrot.slane %v17, 1
  %v33 = vrot.slane %v18, 1
  %v34 = vsel %vm26, %v32, %v33
  %v35 = vrot.slane %v19, 1
  %v36 = vsel %vm26, %v33, %v35
  %vm41 = vcmask 1045504
  %v42 = vrot.slane %v14, 2
  %v43 = vrot.slane %v15, 2
  %v44 = vsel %vm41, %v42, %v43
  %v45 = vrot.slane %v16, 2
  %v46 = vsel %vm41, %v43, %v45
  %v47 = vrot.slane %v17, 2
  %v48 = vrot.slane %v18, 2
  %v49 = vsel %vm41, %v47, %v48
  %v50 = vrot.slane %v19, 2
  %v51 = vsel %vm41, %v48, %v50
  %vm56 = vcmask 1044480
  %v57 = vrot.slane %v14, 3
  %v58 = vrot.slane %v15, 3
  %v59 = vsel %vm56, %v57, %v58
  %v60 = vrot.slane %v16, 3
  %v61 = vsel %vm56, %v58, %v60
  %v62 = vrot.slane %v17, 3
  %v63 = vrot.slane %v18, 3
  %v64 = vsel %vm56, %v62, %v63
  %v65 = vrot.slane %v19, 3
  %v66 = vsel %vm56, %v63, %v65
  %vm71 = vcmask 1043456
  %v72 = vrot.slane %v14, 4
  %v73 = vrot.slane %v15, 4
  %v74 = vsel %vm71, %v72, %v73
  %v75 = vrot.slane %v16, 4
  %v76 = vsel %vm71, %v73, %v75
  %v77 = vrot.slane %v17, 4
  %v78 = vrot.slane %v18, 4
  %v79 = vsel %vm71, %v77, %v78
  %v80 = vrot.slane %v19, 4
  %v81 = vsel %vm71, %v78, %v80
  %v86 = vld [vmem:[%s1] sm:$0xff]
  %v87 = vld [vmem:[%s1 + $0x8] sm:$0xff]
  %v88 = vld [vmem:[%s1 + $0x10] sm:$0xff]
  %v89 = vld [vmem:[%s1 + $0x18] sm:$0xff]
  %v90 = vld [vmem:[%s1 + $0x20] sm:$0xff]
  %v91 = vld [vmem:[%s1 + $0x28] sm:$0xff]
  %v92 = vld [vmem:[%s1 + $0x30] sm:$0xff]
  %v93 = vld [vmem:[%s1 + $0x38] sm:$0xff]
  %v94 = vld [vmem:[%s1 + $0x40] sm:$0xff]
  %v95 = vld [vmem:[%s1 + $0x48] sm:$0xff]
  %v96 = vld [vmem:[%s1 + $0x50] sm:$0xff]
  %v97 = vld [vmem:[%s1 + $0x58] sm:$0xff]
  %v98 = vld [vmem:[%s1 + $0x60] sm:$0xff]
  %v99 = vld [vmem:[%s1 + $0x68] sm:$0xff]
  %v100 = vld [vmem:[%s1 + $0x70] sm:$0xff]
  %v101 = vld [vmem:[%s1 + $0x78] sm:$0xff]
  %v102 = vld [vmem:[%s1 + $0x80] sm:$0xff]
  %v103 = vld [vmem:[%s1 + $0x88] sm:$0xff]
  %v104 = vld [vmem:[%s1 + $0x90] sm:$0xff]
  %v105 = vld [vmem:[%s1 + $0x98] sm:$0xff]
  %v106 = vld [vmem:[%s1 + $0xa0] sm:$0xff]
  %v107 = vld [vmem:[%s1 + $0xa8] sm:$0xff]
  %v108 = vld [vmem:[%s1 + $0xb0] sm:$0xff]
  %v109 = vld [vmem:[%s1 + $0xb8] sm:$0xff]
  %v110 = vld [vmem:[%s1 + $0xc0] sm:$0xff]
  %v111 = vld [vmem:[%s1 + $0xc8] sm:$0xff]
  %v112 = vld [vmem:[%s1 + $0xd0] sm:$0xff]
  %v113 = vld [vmem:[%s1 + $0xd8] sm:$0xff]
  %v114 = vld [vmem:[%s1 + $0xe0] sm:$0xff]
  %v115 = vld [vmem:[%s1 + $0xe8] sm:$0xff]
  %v116 = vld [vmem:[%s1 + $0xf0] sm:$0xff]
  %v117 = vld [vmem:[%s1 + $0xf8] sm:$0xff]
  %v118 = vld [vmem:[%s1 + $0x100] sm:$0xff]
  %v119 = vld [vmem:[%s1 + $0x108] sm:$0xff]
  %v120 = vld [vmem:[%s1 + $0x110] sm:$0xff]
  %v121 = vld [vmem:[%s1 + $0x118] sm:$0xff]
  %v122 = vld [vmem:[%s1 + $0x120] sm:$0xff]
  %v123 = vld [vmem:[%s1 + $0x128] sm:$0xff]
  %v124 = vld [vmem:[%s1 + $0x130] sm:$0xff]
  %v125 = vld [vmem:[%s1 + $0x138] sm:$0xff]
  %v126 = vld [vmem:[%s1 + $0x140] sm:$0xff]
  %v127 = vld [vmem:[%s1 + $0x148] sm:$0xff]
  %v128 = vld [vmem:[%s1 + $0x150] sm:$0xff]
  %v129 = vld [vmem:[%s1 + $0x158] sm:$0xff]
  %v130 = vld [vmem:[%s1 + $0x160] sm:$0xff]
  %v131 = vld [vmem:[%s1 + $0x168] sm:$0xff]
  %v132 = vld [vmem:[%s1 + $0x170] sm:$0xff]
  %v133 = vld [vmem:[%s1 + $0x178] sm:$0xff]
  %v134 = vld [vmem:[%s1 + $0x180] sm:$0xff]
  %v135 = vld [vmem:[%s1 + $0x188] sm:$0xff]
  %v136 = vld [vmem:[%s1 + $0x190] sm:$0xff]
  %v137 = vld [vmem:[%s1 + $0x198] sm:$0xff]
  %v138 = vld [vmem:[%s1 + $0x1a0] sm:$0xff]
  %v139 = vld [vmem:[%s1 + $0x1a8] sm:$0xff]
  %v140 = vld [vmem:[%s1 + $0x1b0] sm:$0xff]
  %v141 = vld [vmem:[%s1 + $0x1b8] sm:$0xff]
  %v142 = vld [vmem:[%s1 + $0x1c0] sm:$0xff]
  %v143 = vld [vmem:[%s1 + $0x1c8] sm:$0xff]
  %v144 = vld [vmem:[%s1 + $0x1d0] sm:$0xff]
  %v145 = vld [vmem:[%s1 + $0x1d8] sm:$0xff]
  %v146 = vld [vmem:[%s1 + $0x1e0] sm:$0xff]
  %v147 = vld [vmem:[%s1 + $0x1e8] sm:$0xff]
  %v148 = vld [vmem:[%s1 + $0x1f0] sm:$0xff]
  %v149 = vld [vmem:[%s1 + $0x1f8] sm:$0xff]
  %v150 = vld [vmem:[%s1 + $0x200] sm:$0xff]
  %v151 = vld [vmem:[%s1 + $0x208] sm:$0xff]
  %v152 = vld [vmem:[%s1 + $0x210] sm:$0xff]
  %v153 = vld [vmem:[%s1 + $0x218] sm:$0xff]
  %v154 = vld [vmem:[%s1 + $0x220] sm:$0xff]
  %v155 = vld [vmem:[%s1 + $0x228] sm:$0xff]
  %v156 = vld [vmem:[%s1 + $0x230] sm:$0xff]
  %v157 = vld [vmem:[%s1 + $0x238] sm:$0xff]
  %v158 = vld [vmem:[%s1 + $0x240] sm:$0xff]
  %v159 = vld [vmem:[%s1 + $0x248] sm:$0xff]
  %v160 = vld [vmem:[%s1 + $0x250] sm:$0xff]
  %v161 = vld [vmem:[%s1 + $0x258] sm:$0xff]
  %v162 = vld [vmem:[%s1 + $0x260] sm:$0xff]
  %v163 = vld [vmem:[%s1 + $0x268] sm:$0xff]
  %v164 = vld [vmem:[%s1 + $0x270] sm:$0xff]
  %v165 = vld [vmem:[%s1 + $0x278] sm:$0xff]
  %v166 = vld [vmem:[%s2] sm:$0x1]
  %v168 = vperm.slane %v166, 0
  %170 = vmatpush.msra.mxu0 %v101
  %171 = vmatpush.msra.mxu0 %v100
  %172 = vmatpush.msra.mxu0 %v99
  %173 = vmatpush.msra.mxu0 %v98
  %174 = vmatpush.msra.mxu0 %v97
  %175 = vmatpush.msra.mxu0 %v96
  %176 = vmatpush.msra.mxu0 %v95
  %177 = vmatpush.msra.mxu0 %v94
  %178 = vmatpush.msra.mxu0 %v93
  %179 = vmatpush.msra.mxu0 %v92
  %180 = vmatpush.msra.mxu0 %v91
  %181 = vmatpush.msra.mxu0 %v90
  %182 = vmatpush.msra.mxu0 %v89
  %183 = vmatpush.msra.mxu0 %v88
  %184 = vmatpush.msra.mxu0 %v87
  %185 = vmatpush.msra.mxu0 %v86
  %186 = vmatmul.f32.gmra.mxu0 %v14
  %v187 = vpop.f32.mrf.mxu0
  %v188 = vadd.f32 %v168, %v187
  %189 = vmatmul.f32.gmra.mxu0 %v15
  %v190 = vpop.f32.mrf.mxu0
  %v191 = vadd.f32 %v168, %v190
  %192 = vmatmul.f32.gmra.mxu0 %v17
  %v193 = vpop.f32.mrf.mxu0
  %v194 = vadd.f32 %v168, %v193
  %195 = vmatmul.f32.gmra.mxu0 %v18
  %v196 = vpop.f32.mrf.mxu0
  %v197 = vadd.f32 %v168, %v196
  %198 = vdwg.mxu0
  %199 = vmatpush.msra.mxu0 %v117
  %200 = vmatpush.msra.mxu0 %v116
  %201 = vmatpush.msra.mxu0 %v115
  %202 = vmatpush.msra.mxu0 %v114
  %203 = vmatpush.msra.mxu0 %v113
  %204 = vmatpush.msra.mxu0 %v112
  %205 = vmatpush.msra.mxu0 %v111
  %206 = vmatpush.msra.mxu0 %v110
  %207 = vmatpush.msra.mxu0 %v109
  %208 = vmatpush.msra.mxu0 %v108
  %209 = vmatpush.msra.mxu0 %v107
  %210 = vmatpush.msra.mxu0 %v106
  %211 = vmatpush.msra.mxu0 %v105
  %212 = vmatpush.msra.mxu0 %v104
  %213 = vmatpush.msra.mxu0 %v103
  %214 = vmatpush.msra.mxu0 %v102
  %215 = vmatmul.f32.gmra.mxu0 %v29
  %v216 = vpop.f32.mrf.mxu0
  %v217 = vadd.f32 %v188, %v216
  %218 = vmatmul.f32.gmra.mxu0 %v31
  %v219 = vpop.f32.mrf.mxu0
  %v220 = vadd.f32 %v191, %v219
  %221 = vmatmul.f32.gmra.mxu0 %v34
  %v222 = vpop.f32.mrf.mxu0
  %v223 = vadd.f32 %v194, %v222
  %224 = vmatmul.f32.gmra.mxu0 %v36
  %v225 = vpop.f32.mrf.mxu0
  %v226 = vadd.f32 %v197, %v225
  %227 = vdwg.mxu0
  %228 = vmatpush.msra.mxu0 %v133
  %229 = vmatpush.msra.mxu0 %v132
  %230 = vmatpush.msra.mxu0 %v131
  %231 = vmatpush.msra.mxu0 %v130
  %232 = vmatpush.msra.mxu0 %v129
  %233 = vmatpush.msra.mxu0 %v128
  %234 = vmatpush.msra.mxu0 %v127
  %235 = vmatpush.msra.mxu0 %v126
  %236 = vmatpush.msra.mxu0 %v125
  %237 = vmatpush.msra.mxu0 %v124
  %238 = vmatpush.msra.mxu0 %v123
  %239 = vmatpush.msra.mxu0 %v122
  %240 = vmatpush.msra.mxu0 %v121
  %241 = vmatpush.msra.mxu0 %v120
  %242 = vmatpush.msra.mxu0 %v119
  %243 = vmatpush.msra.mxu0 %v118
  %244 = vmatmul.f32.gmra.mxu0 %v44
  %v245 = vpop.f32.mrf.mxu0
  %v246 = vadd.f32 %v217, %v245
  %247 = vmatmul.f32.gmra.mxu0 %v46
  %v248 = vpop.f32.mrf.mxu0
  %v249 = vadd.f32 %v220, %v248
  %250 = vmatmul.f32.gmra.mxu0 %v49
  %v251 = vpop.f32.mrf.mxu0
  %v252 = vadd.f32 %v223, %v251
  %253 = vmatmul.f32.gmra.mxu0 %v51
  %v254 = vpop.f32.mrf.mxu0
  %v255 = vadd.f32 %v226, %v254
  %256 = vdwg.mxu0
  %257 = vmatpush.msra.mxu0 %v149
  %258 = vmatpush.msra.mxu0 %v148
  %259 = vmatpush.msra.mxu0 %v147
  %260 = vmatpush.msra.mxu0 %v146
  %261 = vmatpush.msra.mxu0 %v145
  %262 = vmatpush.msra.mxu0 %v144
  %263 = vmatpush.msra.mxu0 %v143
  %264 = vmatpush.msra.mxu0 %v142
  %265 = vmatpush.msra.mxu0 %v141
  %266 = vmatpush.msra.mxu0 %v140
  %267 = vmatpush.msra.mxu0 %v139
  %268 = vmatpush.msra.mxu0 %v138
  %269 = vmatpush.msra.mxu0 %v137
  %270 = vmatpush.msra.mxu0 %v136
  %271 = vmatpush.msra.mxu0 %v135
  %272 = vmatpush.msra.mxu0 %v134
  %273 = vmatmul.f32.gmra.mxu0 %v59
  %v274 = vpop.f32.mrf.mxu0
  %v275 = vadd.f32 %v246, %v274
  %276 = vmatmul.f32.gmra.mxu0 %v61
  %v277 = vpop.f32.mrf.mxu0
  %v278 = vadd.f32 %v249, %v277
  %279 = vmatmul.f32.gmra.mxu0 %v64
  %v280 = vpop.f32.mrf.mxu0
  %v281 = vadd.f32 %v252, %v280
  %282 = vmatmul.f32.gmra.mxu0 %v66
  %v283 = vpop.f32.mrf.mxu0
  %v284 = vadd.f32 %v255, %v283
  %285 = vdwg.mxu0
  %286 = vmatpush.msra.mxu0 %v165
  %287 = vmatpush.msra.mxu0 %v164
  %288 = vmatpush.msra.mxu0 %v163
  %289 = vmatpush.msra.mxu0 %v162
  %290 = vmatpush.msra.mxu0 %v161
  %291 = vmatpush.msra.mxu0 %v160
  %292 = vmatpush.msra.mxu0 %v159
  %293 = vmatpush.msra.mxu0 %v158
  %294 = vmatpush.msra.mxu0 %v157
  %295 = vmatpush.msra.mxu0 %v156
  %296 = vmatpush.msra.mxu0 %v155
  %297 = vmatpush.msra.mxu0 %v154
  %298 = vmatpush.msra.mxu0 %v153
  %299 = vmatpush.msra.mxu0 %v152
  %300 = vmatpush.msra.mxu0 %v151
  %301 = vmatpush.msra.mxu0 %v150
  %302 = vmatmul.f32.gmra.mxu0 %v74
  %v303 = vpop.f32.mrf.mxu0
  %v304 = vadd.f32 %v275, %v303
  %305 = vmatmul.f32.gmra.mxu0 %v76
  %v306 = vpop.f32.mrf.mxu0
  %v307 = vadd.f32 %v278, %v306
  %308 = vmatmul.f32.gmra.mxu0 %v79
  %v309 = vpop.f32.mrf.mxu0
  %v310 = vadd.f32 %v281, %v309
  %311 = vmatmul.f32.gmra.mxu0 %v81
  %v312 = vpop.f32.mrf.mxu0
  %v313 = vadd.f32 %v284, %v312
  %314 = vdwg.mxu0
  %315 = vst [vmem:[%s3] sm:$0xff] %v304
  %316 = vst [vmem:[%s3 + $0x8] sm:$0xff] %v307
  %317 = vst [vmem:[%s3 + $0x10] sm:$0xff] %v310
  %318 = vst [vmem:[%s3 + $0x18] sm:$0xff] %v313
  // Predicated region
  $region14: #{conv_end_forward.1} parent=0 // pred_check
    _
  $region15: #{conv_end_forward.1} parent=0 // pred_check_branch
    %320 = sbr.rel (0) target = $region17
  $region16: #{conv_end_forward.1} parent=0 // pred_region
    _
  $region17: #{conv_end_forward.1} parent=0 // pred_fallthru
    _
  // Predicated region
  $region18: #{conv_end_forward.1} parent=0 // pred_check
    _
  $region19: #{conv_end_forward.1} parent=0 // pred_check_branch
    %322 = sbr.rel (0) target = $region21
  $region20: #{conv_end_forward.1} parent=0 // pred_region
    _
  $region21: #{conv_end_forward.1} parent=0 // pred_fallthru
    _

</llo_original>
